<compile_context>
chip_gen: v7x
topology: tpu7x:2x2x1
jax: 0.10.0
libtpu: 0.0.40
codegen_flags: <defaults>
</compile_context>

<pallas_src>
import functools

import jax
import jax.numpy as jnp
from jax.experimental import pallas as pl
from jax.experimental.pallas import tpu as pltpu

_EPS = 1e-10


# ----------------------------- kernels ---------------------------------------
def _expected_depth_kernel(w_ref, z_ref, depth_ref, zmin_ref, zmax_ref):
    # Cast in-kernel so bf16/f16 inputs only pay their native HBM bandwidth.
    w = w_ref[...].astype(jnp.float32)                   # (TR, S)
    z = z_ref[...].astype(jnp.float32)
    num = jnp.sum(w * z, axis=-1, keepdims=True)         # sum over samples (lanes)
    den = jnp.sum(w, axis=-1, keepdims=True) + _EPS
    depth_ref[...] = num / den
    # Per-row partial min/max of z (XLU filler).  The wrapper reduces these R
    # scalars to the global clip bounds instead of re-reading z from HBM.
    zmin_ref[...] = jnp.min(z, axis=-1, keepdims=True)
    zmax_ref[...] = jnp.max(z, axis=-1, keepdims=True)


def _median_depth_kernel(w_ref, z_ref, tri_ref, depth_ref):
    # torch: idx = searchsorted(cumsum(w), 0.5, side='left'); clamp; gather z.
    z = z_ref[...].astype(jnp.float32)                   # (TR, S)
    tri = tri_ref[...]                                   # (S, S), block-invariant
    w = w_ref[...].astype(tri.dtype)                     # bf16 feed (or f32 if exact)
    s = z.shape[-1]
    # Cumulative weights via an MXU matmul with an upper-triangular ones matrix
    # (keeps the lane-scan off the XLU; the MXU is otherwise idle here).
    cw = jnp.dot(w, tri, preferred_element_type=jnp.float32)   # (TR, S) f32
    ge = cw >= 0.5
    lane = jax.lax.broadcasted_iota(jnp.float32, (1, s), 1)    # (1, S) row, broadcasts
    # first index with cumsum >= 0.5; == S when none (searchsorted 'left')
    idx = jnp.min(jnp.where(ge, lane, float(s)), axis=-1, keepdims=True)
    idx = jnp.minimum(idx, float(s - 1))                 # clamp(0, S-1)
    onehot = lane == idx                                 # (TR, S) exact one-hot
    depth_ref[...] = jnp.sum(jnp.where(onehot, z, 0.0), axis=-1, keepdims=True)


# ----------------------------- sizing helpers ---------------------------------
def _round_up(x, m):
    return (x + m - 1) // m * m


def _cdiv(a, b):
    return -(-a // b)


def _vmem_limit_bytes():
    """Scoped-VMEM request derived from the actual part (v5e/v6e 128 MiB,
    v7x 64 MiB), leaving headroom for Mosaic-internal scratch."""
    cap = None
    try:
        info = pltpu.get_tpu_info()
        cap = int(getattr(info, "vmem_capacity_bytes", 0)) or None
    except Exception:
        cap = None
    if cap is None:
        cap = 64 * 1024 * 1024                 # conservative default (v7x-sized)
    limit = min(int(cap * 3 // 4), 96 * 1024 * 1024)
    return max(limit, 32 * 1024 * 1024)


def _want_core_parallel():
    """Only v7x-class parts (2 TensorCores/chip) benefit from CORE_PARALLEL;
    keep the known-good 'parallel' semantics on single-TC v5e/v6e."""
    try:
        kind = jax.devices()[0].device_kind.lower()
    except Exception:
        return False
    return "7" in kind


def _choose_tile_rows(num_rays, num_samples, in_bytes_per_row, n_f32_temps,
                      vmem_limit, resident_bytes):
    # Per-row VMEM cost of one grid step:
    #   * pipelined inputs: 2 buffers x (w + z) rows at native dtype
    #   * f32 temporaries materialized by in-kernel casts / products / matmul
    #   * per-row f32 outputs, double buffered (small; counted anyway)
    per_row = (2 * in_bytes_per_row
               + n_f32_temps * num_samples * 4
               + 2 * 3 * 4)
    budget = int(vmem_limit * 0.8) - resident_bytes
    tr = max(8, budget // max(per_row, 1))
    tr = min(2048, (tr // 8) * 8)
    tr = max(tr, 8)
    tr = min(tr, _round_up(num_rays, 8))
    # Keep >= 2 grid steps where possible so the grid axis can shard across
    # both TensorCores on v7x (and so the pipeline actually overlaps).
    if num_rays > 8 and _cdiv(num_rays, tr) < 2:
        tr = max(8, _round_up(_cdiv(num_rays, 2), 8))
    return tr


# ----------------------------- wrapper ----------------------------------------
@functools.partial(jax.jit,
                   static_argnames=("method", "exact_median", "core_parallel"))
def _suds_depth_impl(weights, z_vals, *, method, exact_median, core_parallel):
    assert weights.shape == z_vals.shape
    *batch, S, one = weights.shape
    assert one == 1
    R = 1
    for b in batch:
        R *= b

    # Metadata-only reshapes; dtype cast happens inside the kernel.
    w = weights.reshape(R, S)
    z = z_vals.reshape(R, S)
    w_isz = jnp.dtype(w.dtype).itemsize
    z_isz = jnp.dtype(z.dtype).itemsize
    in_bytes_per_row = S * (w_isz + z_isz)

    vmem_limit = _vmem_limit_bytes()

    if method == "median":
        tri_dtype = jnp.float32 if exact_median else jnp.bfloat16
        tri_isz = jnp.dtype(tri_dtype).itemsize
        resident = 2 * S * S * tri_isz            # block-invariant tri, 2 buffers
        n_f32_temps = 4                           # w cast, z cast, cw, select temp
    else:
        resident = 0
        n_f32_temps = 3                           # w cast, z cast, w*z

    TR = _choose_tile_rows(R, S, in_bytes_per_row, n_f32_temps, vmem_limit,
                           resident)
    grid = (_cdiv(R, TR),)

    row_spec = pl.BlockSpec((TR, S), lambda i: (i, 0))
    col_spec = pl.BlockSpec((TR, 1), lambda i: (i, 0))
    semantics = ((pltpu.CORE_PARALLEL,) if (core_parallel and grid[0] >= 2)
                 else ("parallel",))
    compiler_params = pltpu.CompilerParams(
        dimension_semantics=semantics,
        vmem_limit_bytes=vmem_limit,
    )

    if method == "expected":
        cost = pl.CostEstimate(
            flops=int(3 * R * S + R),
            transcendentals=0,
            bytes_accessed=int(R * in_bytes_per_row + 3 * R * 4),
        )
        depth, zmin, zmax = pl.pallas_call(
            _expected_depth_kernel,
            out_shape=(
                jax.ShapeDtypeStruct((R, 1), jnp.float32),
                jax.ShapeDtypeStruct((R, 1), jnp.float32),
                jax.ShapeDtypeStruct((R, 1), jnp.float32),
            ),
            grid_spec=pltpu.PrefetchScalarGridSpec(
                num_scalar_prefetch=0,
                grid=grid,
                in_specs=[row_spec, row_spec],
                out_specs=(col_spec, col_spec, col_spec),
            ),
            compiler_params=compiler_params,
            cost_estimate=cost,
        )(w, z)
        # torch: depth = clip(depth, z_vals.min(), z_vals.max()) — global bounds
        # come from the tiny per-row partials (no second pass over z in HBM).
        depth = jnp.clip(depth, jnp.min(zmin), jnp.max(zmax))
    elif method == "median":
        # Upper-triangular ones (tri[i, j] = 1 iff i <= j) so w @ tri = cumsum(w).
        # Built once in the wrapper and DMA'd as a block-invariant input (no
        # per-step S x S iota rebuild; safe under core-sharded grids, unlike a
        # pl.when(program_id == 0)-initialized scratch).
        tri = jnp.triu(jnp.ones((S, S), jnp.float32)).astype(tri_dtype)
        tri_spec = pl.BlockSpec((S, S), lambda i: (0, 0))
        cost = pl.CostEstimate(
            flops=int(2 * R * S * S + 5 * R * S),
            transcendentals=0,
            bytes_accessed=int(R * in_bytes_per_row + R * 4 + S * S * tri_isz),
        )
        depth = pl.pallas_call(
            _median_depth_kernel,
            out_shape=jax.ShapeDtypeStruct((R, 1), jnp.float32),
            grid_spec=pltpu.PrefetchScalarGridSpec(
                num_scalar_prefetch=0,
                grid=grid,
                in_specs=[row_spec, row_spec, tri_spec],
                out_specs=col_spec,
            ),
            compiler_params=compiler_params,
            cost_estimate=cost,
        )(w, z, tri)
    else:
        raise NotImplementedError(f"Method {method} not implemented")

    return depth.reshape(*batch, 1)


def suds_depth_renderer(weights, z_vals, method: str = "expected",
                        exact_median: bool = False):
    """weights, z_vals: [..., num_samples, 1] -> depth: [..., 1] (float32).

    exact_median=True feeds the median MXU scan in f32 (bit-faithful prefix
    sums); the default bf16 feed halves MXU passes / vreg pressure and can at
    worst shift the median index by one sample when a prefix sum lands within
    rounding distance of 0.5.
    """
    use_cp = _want_core_parallel()
    try:
        return _suds_depth_impl(weights, z_vals, method=method,
                                exact_median=exact_median,
                                core_parallel=use_cp)
    except Exception:
        if not use_cp:
            raise
        # Fallback: some parts / drivers may reject CORE_PARALLEL; re-lower
        # with the plain "parallel" semantics (known-good everywhere).
        return _suds_depth_impl(weights, z_vals, method=method,
                                exact_median=exact_median,
                                core_parallel=False)


# ----------------------------- reference (plain JAX) ---------------------------
def _reference(weights, z_vals, method):
    if method == "expected":
        d = jnp.sum(weights * z_vals, axis=-2) / (jnp.sum(weights, -2) + _EPS)
        return jnp.clip(d, jnp.min(z_vals), jnp.max(z_vals))
    # median: searchsorted(cw, 0.5, side='left') == count of entries strictly < 0.5
    cw = jnp.cumsum(weights[..., 0], axis=-1)
    idx = jnp.sum((cw < 0.5).astype(jnp.int32), axis=-1, keepdims=True)
    idx = jnp.clip(idx, 0, z_vals.shape[-2] - 1)
    return jnp.take_along_axis(z_vals[..., 0], idx, axis=-1)


if __name__ == "__main__":
    key = jax.random.PRNGKey(0)
    k1, k2 = jax.random.split(key)

    # small shapes consistent with the module: [..., num_samples, 1]
    B, NRAYS, S = 2, 64, 32
    raw = jax.random.uniform(k1, (B, NRAYS, S, 1), dtype=jnp.float32)
    # Quantize weights to multiples of 2^-10 with <= 6 mantissa bits so every
    # prefix sum is exact in both the bf16-fed MXU scan and the f32 reference
    # cumsum (the 0.5 median threshold never falls inside rounding noise).
    weights = jnp.floor(raw * 64.0) / 1024.0
    z_vals = jnp.sort(
        jax.random.uniform(k2, (B, NRAYS, S, 1), minval=0.5, maxval=10.0,
                           dtype=jnp.float32), axis=-2)

    checks = [("expected", False), ("median", False), ("median", True)]
    for method, exact in checks:
        out = suds_depth_renderer(weights, z_vals, method=method,
                                  exact_median=exact)
        jax.block_until_ready(out)
        assert out.shape == (B, NRAYS, 1), out.shape
        ref = _reference(weights, z_vals, method)
        assert jnp.allclose(out, ref, atol=1e-5, rtol=1e-5), (
            f"{method} (exact={exact}): max abs err "
            f"{jnp.max(jnp.abs(out - ref))}")

    print("KERNEL_OK")
</pallas_src>

<mosaic_0001>
module attributes {stable_mosaic.version = 11 : i64} {
  func.func @_expected_depth_kernel(%arg0: i32, %arg1: memref<64x32xf32, #tpu.memory_space<vmem>>, %arg2: memref<64x32xf32, #tpu.memory_space<vmem>>, %arg3: memref<64x1xf32, #tpu.memory_space<vmem>>, %arg4: memref<64x1xf32, #tpu.memory_space<vmem>>, %arg5: memref<64x1xf32, #tpu.memory_space<vmem>>) attributes {dimension_semantics = [#tpu.dimension_semantics<parallel>], iteration_bounds = array<i64: 2>, scalar_prefetch = 0 : i64, scratch_operands = 0 : i64, tpu.core_type = #tpu.core_type<tc>, window_params = [{transform_indices = @transform_0, window_bounds = array<i64: 64, 32>}, {transform_indices = @transform_1, window_bounds = array<i64: 64, 32>}, {transform_indices = @transform_2, window_bounds = array<i64: 64, 1>}, {transform_indices = @transform_3, window_bounds = array<i64: 64, 1>}, {transform_indices = @transform_4, window_bounds = array<i64: 64, 1>}]} {
    %c0 = arith.constant 0 : index
    %c0_0 = arith.constant 0 : index
    %0 = vector.load %arg1[%c0, %c0_0] : memref<64x32xf32, #tpu.memory_space<vmem>>, vector<64x32xf32>
    %c0_1 = arith.constant 0 : index
    %c0_2 = arith.constant 0 : index
    %1 = vector.load %arg2[%c0_1, %c0_2] : memref<64x32xf32, #tpu.memory_space<vmem>>, vector<64x32xf32>
    %2 = arith.mulf %0, %1 : vector<64x32xf32>
    %cst = arith.constant dense<0.000000e+00> : vector<64xf32>
    %3 = vector.multi_reduction <add>, %2, %cst [1] : vector<64x32xf32> to vector<64xf32>
    %4 = vector.shape_cast %3 : vector<64xf32> to vector<64x1xf32>
    %cst_3 = arith.constant dense<0.000000e+00> : vector<64xf32>
    %5 = vector.multi_reduction <add>, %0, %cst_3 [1] : vector<64x32xf32> to vector<64xf32>
    %6 = vector.shape_cast %5 : vector<64xf32> to vector<64x1xf32>
    %cst_4 = arith.constant 1.000000e-10 : f32
    %7 = vector.broadcast %cst_4 : f32 to vector<64x1xf32>
    %8 = arith.addf %6, %7 : vector<64x1xf32>
    %9 = arith.divf %4, %8 : vector<64x1xf32>
    %c0_5 = arith.constant 0 : index
    %c0_6 = arith.constant 0 : index
    %10 = vector.load %arg3[%c0_5, %c0_6] : memref<64x1xf32, #tpu.memory_space<vmem>>, vector<64x1xf32>
    tpu.vector_store %arg3[%c0_5, %c0_6], %9 {strides = array<i32>} : memref<64x1xf32, #tpu.memory_space<vmem>>, vector<64x1xf32>,
    %cst_7 = arith.constant dense<0x7F800000> : vector<64xf32>
    %11 = vector.multi_reduction <minimumf>, %1, %cst_7 [1] : vector<64x32xf32> to vector<64xf32>
    %12 = vector.shape_cast %11 : vector<64xf32> to vector<64x1xf32>
    %c0_8 = arith.constant 0 : index
    %c0_9 = arith.constant 0 : index
    %13 = vector.load %arg4[%c0_8, %c0_9] : memref<64x1xf32, #tpu.memory_space<vmem>>, vector<64x1xf32>
    tpu.vector_store %arg4[%c0_8, %c0_9], %12 {strides = array<i32>} : memref<64x1xf32, #tpu.memory_space<vmem>>, vector<64x1xf32>,
    %cst_10 = arith.constant dense<0xFF800000> : vector<64xf32>
    %14 = vector.multi_reduction <maximumf>, %1, %cst_10 [1] : vector<64x32xf32> to vector<64xf32>
    %15 = vector.shape_cast %14 : vector<64xf32> to vector<64x1xf32>
    %c0_11 = arith.constant 0 : index
    %c0_12 = arith.constant 0 : index
    %16 = vector.load %arg5[%c0_11, %c0_12] : memref<64x1xf32, #tpu.memory_space<vmem>>, vector<64x1xf32>
    tpu.vector_store %arg5[%c0_11, %c0_12], %15 {strides = array<i32>} : memref<64x1xf32, #tpu.memory_space<vmem>>, vector<64x1xf32>,
    return
  }
  func.func @transform_0(%arg0: i32) -> (i32, i32) {
    %c0_i32 = arith.constant 0 : i32
    %c0_i32_0 = arith.constant 0 : i32
    return %arg0, %c0_i32 : i32, i32
  }
  func.func @transform_1(%arg0: i32) -> (i32, i32) {
    %c0_i32 = arith.constant 0 : i32
    %c0_i32_0 = arith.constant 0 : i32
    return %arg0, %c0_i32 : i32, i32
  }
  func.func @transform_2(%arg0: i32) -> (i32, i32) {
    %c0_i32 = arith.constant 0 : i32
    %c0_i32_0 = arith.constant 0 : i32
    return %arg0, %c0_i32 : i32, i32
  }
  func.func @transform_3(%arg0: i32) -> (i32, i32) {
    %c0_i32 = arith.constant 0 : i32
    %c0_i32_0 = arith.constant 0 : i32
    return %arg0, %c0_i32 : i32, i32
  }
  func.func @transform_4(%arg0: i32) -> (i32, i32) {
    %c0_i32 = arith.constant 0 : i32
    %c0_i32_0 = arith.constant 0 : i32
    return %arg0, %c0_i32 : i32, i32
  }
}

</mosaic_0001>

<llo_original>
// kernel: _suds_depth_impl.1
$region0: #{_suds_depth_impl.1}
  #allocation0 [shape = 'u32[]', space=smem, size = 0x4, offset = 0x4, fixed_abs, tag = 'smem constant byte address 0x4 - core index']
  #allocation1 [shape = 'u32[144,128]{1,0:T(1,128)}', space=vmem, size = 0x12000, scoped, tag = 'internal scratch']
  %s0 = inlined_call_operand.vmem [shape: f32[128,32], index: 0, kind: input, shape index: {}]
  %s1 = inlined_call_operand.vmem [shape: f32[128,32], index: 1, kind: input, shape index: {}]
  %s2 = inlined_call_operand.vmem [shape: f32[128,1], index: 2, kind: output, shape index: {0}]
  %s3 = inlined_call_operand.vmem [shape: f32[128,1], index: 3, kind: output, shape index: {1}]
  %s4 = inlined_call_operand.vmem [shape: f32[128,1], index: 4, kind: output, shape index: {2}]
  %5 = xla_tuple %s2, %s3, %s4
  %s6 = sld [smem:[#allocation0]]
  $region57: #{_suds_depth_impl.1} parent=0
    _
  %s8 = ssub.s32 1, %s6
  %s9 = scalar_select 0, %s8, %s6
  loop: start=0, step=1, limit=4
  $region2: #{_suds_depth_impl.1} parent=0 // loop_pre_header
    _
  $region3: #{_suds_depth_impl.1} parent=0 // loop_header
    %s11 = sphi 0, %s15
    %p12 = scmp.ge.s32.totalorder %s11, 4
    %s21 = sphi 0, %s23
    %s24 = sphi 0, %s21
    %s25 = sphi 0, %s24
    %s41 = sphi 0, %s25
    %s47 = sphi 0, %s49
    %s50 = sphi 0, %s47
    %s51 = sphi 0, %s50
    %s67 = sphi 0, %s51
    %s73 = sphi 0, %s75
    %s76 = sphi 0, %s73
    %s77 = sphi 0, %s76
    %s93 = sphi 0, %s77
    %s99 = sphi 0, %s101
    %s102 = sphi 0, %s99
    %s103 = sphi 0, %s102
    %s119 = sphi 0, %s103
    %s125 = sphi 0, %s127
    %s128 = sphi 0, %s125
    %s129 = sphi 0, %s128
    %s145 = sphi 0, %s129
  $region4: #{_suds_depth_impl.1} parent=0 // loop_header_branch
    %14 = sbr.rel (%p12) target = $region8
  $region5: #{_suds_depth_impl.1} parent=0 // loop_body
    %s16 = ssub.s32 %s11, 1
    %s17 = ssub.s32 %s11, 2
    %s18 = sadd.s32 %s11, 1
    %s19 = ssub.s32 %s11, %s18
    %p20 = scmp.eq.s32.totalorder %s19, 0
    %s22 = sadd.s32 %s21, 1
    %s23 = scalar_select %p20, %s21, %s22
    %p26 = pneg %p20
    %p27 = scmp.eq.s32.totalorder %s11, 1
    %p28 = por %p26, %p27
    %p29 = scmp.ne.s32.totalorder %s21, %s24
    %p30 = scmp.eq.s32.totalorder %s11, 0
    %p31 = por %p29, %p30
    %p32 = scmp.ne.s32.totalorder %s21, %s24
    %p33 = scmp.eq.s32.totalorder %s16, 1
    %p34 = por %p32, %p33
    %p35 = scmp.ne.s32.totalorder %s24, %s25
    %p36 = scmp.eq.s32.totalorder %s16, 0
    %p37 = por %p35, %p36
    %p38 = scmp.ne.s32.totalorder %s24, %s25
    %p39 = scmp.eq.s32.totalorder %s17, 1
    %p40 = por %p38, %p39
    %p42 = scmp.ne.s32.totalorder %s25, %s41
    %p43 = scmp.eq.s32.totalorder %s17, 0
    %p44 = por %p42, %p43
    %s45 = ssub.s32 %s11, %s18
    %p46 = scmp.eq.s32.totalorder %s45, 0
    %s48 = sadd.s32 %s47, 1
    %s49 = scalar_select %p46, %s47, %s48
    %p52 = pneg %p46
    %p53 = scmp.eq.s32.totalorder %s11, 1
    %p54 = por %p52, %p53
    %p55 = scmp.ne.s32.totalorder %s47, %s50
    %p56 = scmp.eq.s32.totalorder %s11, 0
    %p57 = por %p55, %p56
    %p58 = scmp.ne.s32.totalorder %s47, %s50
    %p59 = scmp.eq.s32.totalorder %s16, 1
    %p60 = por %p58, %p59
    %p61 = scmp.ne.s32.totalorder %s50, %s51
    %p62 = scmp.eq.s32.totalorder %s16, 0
    %p63 = por %p61, %p62
    %p64 = scmp.ne.s32.totalorder %s50, %s51
    %p65 = scmp.eq.s32.totalorder %s17, 1
    %p66 = por %p64, %p65
    %p68 = scmp.ne.s32.totalorder %s51, %s67
    %p69 = scmp.eq.s32.totalorder %s17, 0
    %p70 = por %p68, %p69
    %s71 = ssub.s32 %s11, %s18
    %p72 = scmp.eq.s32.totalorder %s71, 0
    %s74 = sadd.s32 %s73, 1
    %s75 = scalar_select %p72, %s73, %s74
    %p78 = pneg %p72
    %p79 = scmp.eq.s32.totalorder %s11, 1
    %p80 = por %p78, %p79
    %p81 = scmp.ne.s32.totalorder %s73, %s76
    %p82 = scmp.eq.s32.totalorder %s11, 0
    %p83 = por %p81, %p82
    %p84 = scmp.ne.s32.totalorder %s73, %s76
    %p85 = scmp.eq.s32.totalorder %s16, 1
    %p86 = por %p84, %p85
    %p87 = scmp.ne.s32.totalorder %s76, %s77
    %p88 = scmp.eq.s32.totalorder %s16, 0
    %p89 = por %p87, %p88
    %p90 = scmp.ne.s32.totalorder %s76, %s77
    %p91 = scmp.eq.s32.totalorder %s17, 1
    %p92 = por %p90, %p91
    %p94 = scmp.ne.s32.totalorder %s77, %s93
    %p95 = scmp.eq.s32.totalorder %s17, 0
    %p96 = por %p94, %p95
    %s97 = ssub.s32 %s11, %s18
    %p98 = scmp.eq.s32.totalorder %s97, 0
    %s100 = sadd.s32 %s99, 1
    %s101 = scalar_select %p98, %s99, %s100
    %p104 = pneg %p98
    %p105 = scmp.eq.s32.totalorder %s11, 1
    %p106 = por %p104, %p105
    %p107 = scmp.ne.s32.totalorder %s99, %s102
    %p108 = scmp.eq.s32.totalorder %s11, 0
    %p109 = por %p107, %p108
    %p110 = scmp.ne.s32.totalorder %s99, %s102
    %p111 = scmp.eq.s32.totalorder %s16, 1
    %p112 = por %p110, %p111
    %p113 = scmp.ne.s32.totalorder %s102, %s103
    %p114 = scmp.eq.s32.totalorder %s16, 0
    %p115 = por %p113, %p114
    %p116 = scmp.ne.s32.totalorder %s102, %s103
    %p117 = scmp.eq.s32.totalorder %s17, 1
    %p118 = por %p116, %p117
    %p120 = scmp.ne.s32.totalorder %s103, %s119
    %p121 = scmp.eq.s32.totalorder %s17, 0
    %p122 = por %p120, %p121
    %s123 = ssub.s32 %s11, %s18
    %p124 = scmp.eq.s32.totalorder %s123, 0
    %s126 = sadd.s32 %s125, 1
    %s127 = scalar_select %p124, %s125, %s126
    %p130 = pneg %p124
    %p131 = scmp.eq.s32.totalorder %s11, 1
    %p132 = por %p130, %p131
    %p133 = scmp.ne.s32.totalorder %s125, %s128
    %p134 = scmp.eq.s32.totalorder %s11, 0
    %p135 = por %p133, %p134
    %p136 = scmp.ne.s32.totalorder %s125, %s128
    %p137 = scmp.eq.s32.totalorder %s16, 1
    %p138 = por %p136, %p137
    %p139 = scmp.ne.s32.totalorder %s128, %s129
    %p140 = scmp.eq.s32.totalorder %s16, 0
    %p141 = por %p139, %p140
    %p142 = scmp.ne.s32.totalorder %s128, %s129
    %p143 = scmp.eq.s32.totalorder %s17, 1
    %p144 = por %p142, %p143
    %p146 = scmp.ne.s32.totalorder %s129, %s145
    %p147 = scmp.eq.s32.totalorder %s17, 0
    %p148 = por %p146, %p147
    %p149 = scmp.le.s32.totalorder 1, %s11
    %p150 = scmp.lt.s32.totalorder %s11, 3
    %p151 = pnand %p149, %p150
    %p152 = pneg %p151
    // Predicated region
    $region9: #{_suds_depth_impl.1} parent=5 // pred_check
      _
    $region10: #{_suds_depth_impl.1} parent=5 // pred_check_branch
      %154 = sbr.rel (%p151) target = $region12
    $region11: #{_suds_depth_impl.1} parent=5 // pred_region
      %s155 = ssub.s32 %s11, 1
    $region12: #{_suds_depth_impl.1} parent=5 // pred_fallthru
      _
    %p156 = scmp.lt.s32.totalorder %s11, 2
    // Predicated region
    $region13: #{_suds_depth_impl.1} parent=5 // pred_check
      %p157 = pneg %p156
    $region14: #{_suds_depth_impl.1} parent=5 // pred_check_branch
      %159 = sbr.rel (%p157) target = $region16
    $region15: #{_suds_depth_impl.1} parent=5 // pred_region
      // Predicated region
      $region17: #{_suds_depth_impl.1} parent=15 // pred_check
        %p160 = pneg %p31
      $region18: #{_suds_depth_impl.1} parent=15 // pred_check_branch
        %162 = sbr.rel (%p160) target = $region20
      $region19: #{_suds_depth_impl.1} parent=15 // pred_region
        %s163 = smul.u32 8, %s11
        %p164 = scmp.lt.s32.totalorder %s163, 15
        %s165 = scalar_select %p164, %s163, 15
        %s166 = smul.addr %s165, 8
        %s167 = scalar_lea.vmem %s0, %s166
        %s168 = smul.u32 8, %s11
      $region20: #{_suds_depth_impl.1} parent=15 // pred_fallthru
        _
      // Predicated region
      $region21: #{_suds_depth_impl.1} parent=15 // pred_check
        %p169 = pneg %p57
      $region22: #{_suds_depth_impl.1} parent=15 // pred_check_branch
        %171 = sbr.rel (%p169) target = $region24
      $region23: #{_suds_depth_impl.1} parent=15 // pred_region
        %s172 = smul.u32 8, %s11
        %p173 = scmp.lt.s32.totalorder %s172, 15
        %s174 = scalar_select %p173, %s172, 15
        %s175 = smul.addr %s174, 8
        %s176 = scalar_lea.vmem %s1, %s175
        %s177 = smul.u32 8, %s11
      $region24: #{_suds_depth_impl.1} parent=15 // pred_fallthru
        _
    $region16: #{_suds_depth_impl.1} parent=5 // pred_fallthru
      _
    %p178 = scmp.le.s32.totalorder 1, %s11
    %p179 = scmp.lt.s32.totalorder %s11, 3
    %p180 = pnand %p178, %p179
    %p181 = pneg %p180
    // Predicated region
    $region25: #{_suds_depth_impl.1} parent=5 // pred_check
      _
    $region26: #{_suds_depth_impl.1} parent=5 // pred_check_branch
      %183 = sbr.rel (%p180) target = $region28
    $region27: #{_suds_depth_impl.1} parent=5 // pred_region
      %s184 = ssub.s32 %s11, 1
      %s185 = smul.u32 8, %s16
      %p186 = scmp.lt.s32.totalorder %s185, 15
      %s187 = scalar_select %p186, %s185, 15
      %s188 = smul.addr %s187, 8
      %s189 = scalar_lea.vmem %s0, %s188
      %p190 = pneg %p37
      %p191 = pneg %p34
      %s192 = smul.u32 8, %s16
      %p193 = scmp.lt.s32.totalorder %s192, 15
      %s194 = scalar_select %p193, %s192, 15
      %s195 = smul.addr %s194, 8
      %s196 = scalar_lea.vmem %s1, %s195
      %p197 = pneg %p63
      %p198 = pneg %p60
      %p199 = pneg %p89
      %p200 = pneg %p86
      %s201 = smul.u32 8, %s16
      %p202 = scmp.lt.s32.totalorder %s201, 15
      %s203 = scalar_select %p202, %s201, 15
      %s204 = smul.addr %s203, 8
      %s205 = scalar_lea.vmem %s2, %s204
      %p206 = pneg %p115
      %p207 = pneg %p112
      %s208 = smul.u32 8, %s16
      %p209 = scmp.lt.s32.totalorder %s208, 15
      %s210 = scalar_select %p209, %s208, 15
      %s211 = smul.addr %s210, 8
      %s212 = scalar_lea.vmem %s3, %s211
      %p213 = pneg %p141
      %p214 = pneg %p138
      %s215 = smul.u32 8, %s16
      %p216 = scmp.lt.s32.totalorder %s215, 15
      %s217 = scalar_select %p216, %s215, 15
      %s218 = smul.addr %s217, 8
      %s219 = scalar_lea.vmem %s4, %s218
      %s220 = smul.u32 8, %s16
      %p221 = scmp.lt.s32.totalorder %s220, 15
      %s222 = scalar_select %p221, %s220, 15
      %s223 = smul.addr %s222, 8
      %s224 = scalar_lea.vmem %s0, %s223
      %s225 = smul.u32 8, %s16
      %s226 = smul.u32 8, %s16
      %p227 = scmp.lt.s32.totalorder %s226, 15
      %s228 = scalar_select %p227, %s226, 15
      %s229 = smul.addr %s228, 8
      %s230 = scalar_lea.vmem %s1, %s229
      %s231 = smul.u32 8, %s16
      %s232 = smul.u32 8, %s16
      %p233 = scmp.lt.s32.totalorder %s232, 15
      %s234 = scalar_select %p233, %s232, 15
      %s235 = smul.addr %s234, 8
      %s236 = scalar_lea.vmem %s2, %s235
      %s237 = smul.u32 8, %s16
      %s238 = smul.u32 8, %s16
      %p239 = scmp.lt.s32.totalorder %s238, 15
      %s240 = scalar_select %p239, %s238, 15
      %s241 = smul.addr %s240, 8
      %s242 = scalar_lea.vmem %s3, %s241
      %s243 = smul.u32 8, %s16
      %s244 = smul.u32 8, %s16
      %p245 = scmp.lt.s32.totalorder %s244, 15
      %s246 = scalar_select %p245, %s244, 15
      %s247 = smul.addr %s246, 8
      %s248 = scalar_lea.vmem %s4, %s247
      %s249 = smul.u32 8, %s16
      %v250 = vld [vmem:[%s224] sm:$0xff]
      %v251 = vld [vmem:[%s224 + $0x8] sm:$0xff]
      %v252 = vld [vmem:[%s224 + $0x10] sm:$0xff]
      %v253 = vld [vmem:[%s224 + $0x18] sm:$0xff]
      %v254 = vld [vmem:[%s224 + $0x20] sm:$0xff]
      %v255 = vld [vmem:[%s224 + $0x28] sm:$0xff]
      %v256 = vld [vmem:[%s224 + $0x30] sm:$0xff]
      %v257 = vld [vmem:[%s224 + $0x38] sm:$0xff]
      %v258 = vld [vmem:[%s230] sm:$0xff]
      %v259 = vld [vmem:[%s230 + $0x8] sm:$0xff]
      %v260 = vld [vmem:[%s230 + $0x10] sm:$0xff]
      %v261 = vld [vmem:[%s230 + $0x18] sm:$0xff]
      %v262 = vld [vmem:[%s230 + $0x20] sm:$0xff]
      %v263 = vld [vmem:[%s230 + $0x28] sm:$0xff]
      %v264 = vld [vmem:[%s230 + $0x30] sm:$0xff]
      %v265 = vld [vmem:[%s230 + $0x38] sm:$0xff]
      %v266 = vmul.f32 %v250, %v258
      %v267 = vmul.f32 %v251, %v259
      %v268 = vmul.f32 %v252, %v260
      %v269 = vmul.f32 %v253, %v261
      %v270 = vmul.f32 %v254, %v262
      %v271 = vmul.f32 %v255, %v263
      %v272 = vmul.f32 %v256, %v264
      %v273 = vmul.f32 %v257, %v265
      %vm274 = vcmask 261120
      %v275 = vsel %vm274, %v266, 0.0
      %276 = vadd.xlane.f32.xlu0 %v275
      %v277 = vpop.xlane.xlu0 %276
      %v278 = vsel %vm274, %v267, 0.0
      %279 = vadd.xlane.f32.xlu0 %v278
      %v280 = vpop.xlane.xlu0 %279
      %v281 = vsel %vm274, %v268, 0.0
      %282 = vadd.xlane.f32.xlu0 %v281
      %v283 = vpop.xlane.xlu0 %282
      %v284 = vsel %vm274, %v269, 0.0
      %285 = vadd.xlane.f32.xlu0 %v284
      %v286 = vpop.xlane.xlu0 %285
      %v287 = vsel %vm274, %v270, 0.0
      %288 = vadd.xlane.f32.xlu0 %v287
      %v289 = vpop.xlane.xlu0 %288
      %v290 = vsel %vm274, %v271, 0.0
      %291 = vadd.xlane.f32.xlu0 %v290
      %v292 = vpop.xlane.xlu0 %291
      %v293 = vsel %vm274, %v272, 0.0
      %294 = vadd.xlane.f32.xlu0 %v293
      %v295 = vpop.xlane.xlu0 %294
      %v296 = vsel %vm274, %v273, 0.0
      %297 = vadd.xlane.f32.xlu0 %v296
      %v298 = vpop.xlane.xlu0 %297
      %v299 = vsel %vm274, %v250, 0.0
      %300 = vadd.xlane.f32.xlu0 %v299
      %v301 = vpop.xlane.xlu0 %300
      %v302 = vsel %vm274, %v251, 0.0
      %303 = vadd.xlane.f32.xlu0 %v302
      %v304 = vpop.xlane.xlu0 %303
      %v305 = vsel %vm274, %v252, 0.0
      %306 = vadd.xlane.f32.xlu0 %v305
      %v307 = vpop.xlane.xlu0 %306
      %v308 = vsel %vm274, %v253, 0.0
      %309 = vadd.xlane.f32.xlu0 %v308
      %v310 = vpop.xlane.xlu0 %309
      %v311 = vsel %vm274, %v254, 0.0
      %312 = vadd.xlane.f32.xlu0 %v311
      %v313 = vpop.xlane.xlu0 %312
      %v314 = vsel %vm274, %v255, 0.0
      %315 = vadd.xlane.f32.xlu0 %v314
      %v316 = vpop.xlane.xlu0 %315
      %v317 = vsel %vm274, %v256, 0.0
      %318 = vadd.xlane.f32.xlu0 %v317
      %v319 = vpop.xlane.xlu0 %318
      %v320 = vsel %vm274, %v257, 0.0
      %321 = vadd.xlane.f32.xlu0 %v320
      %v322 = vpop.xlane.xlu0 %321
      %v323 = vadd.f32 %v301, 1e-10
      %v324 = vadd.f32 %v304, 1e-10
      %v325 = vadd.f32 %v307, 1e-10
      %v326 = vadd.f32 %v310, 1e-10
      %v327 = vadd.f32 %v313, 1e-10
      %v328 = vadd.f32 %v316, 1e-10
      %v329 = vadd.f32 %v319, 1e-10
      %v330 = vadd.f32 %v322, 1e-10
      %v331 = vrcp.pop %v323
      %v332 = vmul.f32 %v277, %v331
      %v333 = vrcp.pop %v324
      %v334 = vmul.f32 %v280, %v333
      %v335 = vrcp.pop %v325
      %v336 = vmul.f32 %v283, %v335
      %v337 = vrcp.pop %v326
      %v338 = vmul.f32 %v286, %v337
      %v339 = vrcp.pop %v327
      %v340 = vmul.f32 %v289, %v339
      %v341 = vrcp.pop %v328
      %v342 = vmul.f32 %v292, %v341
      %v343 = vrcp.pop %v329
      %v344 = vmul.f32 %v295, %v343
      %v345 = vrcp.pop %v330
      %v346 = vmul.f32 %v298, %v345
      %vm347 = vcmask 7168
      %348 = vst.msk [vmem:[%s236] sm:$0xff] %vm347, %v332
      %349 = vst.msk [vmem:[%s236 + $0x8] sm:$0xff] %vm347, %v334
      %350 = vst.msk [vmem:[%s236 + $0x10] sm:$0xff] %vm347, %v336
      %351 = vst.msk [vmem:[%s236 + $0x18] sm:$0xff] %vm347, %v338
      %352 = vst.msk [vmem:[%s236 + $0x20] sm:$0xff] %vm347, %v340
      %353 = vst.msk [vmem:[%s236 + $0x28] sm:$0xff] %vm347, %v342
      %354 = vst.msk [vmem:[%s236 + $0x30] sm:$0xff] %vm347, %v344
      %355 = vst.msk [vmem:[%s236 + $0x38] sm:$0xff] %vm347, %v346
      %v356 = vsel %vm274, %v258, inf
      %357 = vmin.xlane.f32.xlu0 %v356
      %v358 = vpop.xlane.xlu0 %357
      %v359 = vsel %vm274, %v259, inf
      %360 = vmin.xlane.f32.xlu0 %v359
      %v361 = vpop.xlane.xlu0 %360
      %v362 = vsel %vm274, %v260, inf
      %363 = vmin.xlane.f32.xlu0 %v362
      %v364 = vpop.xlane.xlu0 %363
      %v365 = vsel %vm274, %v261, inf
      %366 = vmin.xlane.f32.xlu0 %v365
      %v367 = vpop.xlane.xlu0 %366
      %v368 = vsel %vm274, %v262, inf
      %369 = vmin.xlane.f32.xlu0 %v368
      %v370 = vpop.xlane.xlu0 %369
      %v371 = vsel %vm274, %v263, inf
      %372 = vmin.xlane.f32.xlu0 %v371
      %v373 = vpop.xlane.xlu0 %372
      %v374 = vsel %vm274, %v264, inf
      %375 = vmin.xlane.f32.xlu0 %v374
      %v376 = vpop.xlane.xlu0 %375
      %v377 = vsel %vm274, %v265, inf
      %378 = vmin.xlane.f32.xlu0 %v377
      %v379 = vpop.xlane.xlu0 %378
      %380 = vst.msk [vmem:[%s242] sm:$0xff] %vm347, %v358
      %381 = vst.msk [vmem:[%s242 + $0x8] sm:$0xff] %vm347, %v361
      %382 = vst.msk [vmem:[%s242 + $0x10] sm:$0xff] %vm347, %v364
      %383 = vst.msk [vmem:[%s242 + $0x18] sm:$0xff] %vm347, %v367
      %384 = vst.msk [vmem:[%s242 + $0x20] sm:$0xff] %vm347, %v370
      %385 = vst.msk [vmem:[%s242 + $0x28] sm:$0xff] %vm347, %v373
      %386 = vst.msk [vmem:[%s242 + $0x30] sm:$0xff] %vm347, %v376
      %387 = vst.msk [vmem:[%s242 + $0x38] sm:$0xff] %vm347, %v379
      %v388 = vsel %vm274, %v258, -inf
      %389 = vmax.xlane.f32.xlu0 %v388
      %v390 = vpop.xlane.xlu0 %389
      %v391 = vsel %vm274, %v259, -inf
      %392 = vmax.xlane.f32.xlu0 %v391
      %v393 = vpop.xlane.xlu0 %392
      %v394 = vsel %vm274, %v260, -inf
      %395 = vmax.xlane.f32.xlu0 %v394
      %v396 = vpop.xlane.xlu0 %395
      %v397 = vsel %vm274, %v261, -inf
      %398 = vmax.xlane.f32.xlu0 %v397
      %v399 = vpop.xlane.xlu0 %398
      %v400 = vsel %vm274, %v262, -inf
      %401 = vmax.xlane.f32.xlu0 %v400
      %v402 = vpop.xlane.xlu0 %401
      %v403 = vsel %vm274, %v263, -inf
      %404 = vmax.xlane.f32.xlu0 %v403
      %v405 = vpop.xlane.xlu0 %404
      %v406 = vsel %vm274, %v264, -inf
      %407 = vmax.xlane.f32.xlu0 %v406
      %v408 = vpop.xlane.xlu0 %407
      %v409 = vsel %vm274, %v265, -inf
      %410 = vmax.xlane.f32.xlu0 %v409
      %v411 = vpop.xlane.xlu0 %410
      %412 = vst.msk [vmem:[%s248] sm:$0xff] %vm347, %v390
      %413 = vst.msk [vmem:[%s248 + $0x8] sm:$0xff] %vm347, %v393
      %414 = vst.msk [vmem:[%s248 + $0x10] sm:$0xff] %vm347, %v396
      %415 = vst.msk [vmem:[%s248 + $0x18] sm:$0xff] %vm347, %v399
      %416 = vst.msk [vmem:[%s248 + $0x20] sm:$0xff] %vm347, %v402
      %417 = vst.msk [vmem:[%s248 + $0x28] sm:$0xff] %vm347, %v405
      %418 = vst.msk [vmem:[%s248 + $0x30] sm:$0xff] %vm347, %v408
      %419 = vst.msk [vmem:[%s248 + $0x38] sm:$0xff] %vm347, %v411
      %s420 = smul.u32 8, %s16
      %p421 = scmp.lt.s32.totalorder %s420, 15
      %s422 = scalar_select %p421, %s420, 15
      %s423 = smul.addr %s422, 8
      %s424 = scalar_lea.vmem %s2, %s423
      %s425 = smul.u32 8, %s16
      %p426 = scmp.lt.s32.totalorder %s425, 15
      %s427 = scalar_select %p426, %s425, 15
      %s428 = smul.addr %s427, 8
      %s429 = scalar_lea.vmem %s3, %s428
      %s430 = smul.u32 8, %s16
      %p431 = scmp.lt.s32.totalorder %s430, 15
      %s432 = scalar_select %p431, %s430, 15
      %s433 = smul.addr %s432, 8
      %s434 = scalar_lea.vmem %s4, %s433
      // Predicated region
      $region29: #{_suds_depth_impl.1} parent=27 // pred_check
        %p435 = pneg %p86
      $region30: #{_suds_depth_impl.1} parent=27 // pred_check_branch
        %437 = sbr.rel (%p435) target = $region32
      $region31: #{_suds_depth_impl.1} parent=27 // pred_region
        %s438 = smul.u32 8, %s16
      $region32: #{_suds_depth_impl.1} parent=27 // pred_fallthru
        _
      // Predicated region
      $region33: #{_suds_depth_impl.1} parent=27 // pred_check
        %p439 = pneg %p112
      $region34: #{_suds_depth_impl.1} parent=27 // pred_check_branch
        %441 = sbr.rel (%p439) target = $region36
      $region35: #{_suds_depth_impl.1} parent=27 // pred_region
        %s442 = smul.u32 8, %s16
      $region36: #{_suds_depth_impl.1} parent=27 // pred_fallthru
        _
      // Predicated region
      $region37: #{_suds_depth_impl.1} parent=27 // pred_check
        %p443 = pneg %p138
      $region38: #{_suds_depth_impl.1} parent=27 // pred_check_branch
        %445 = sbr.rel (%p443) target = $region40
      $region39: #{_suds_depth_impl.1} parent=27 // pred_region
        %s446 = smul.u32 8, %s16
      $region40: #{_suds_depth_impl.1} parent=27 // pred_fallthru
        _
    $region28: #{_suds_depth_impl.1} parent=5 // pred_fallthru
      _
    %p447 = scmp.le.s32.totalorder 2, %s11
    // Predicated region
    $region41: #{_suds_depth_impl.1} parent=5 // pred_check
      %p448 = pneg %p447
    $region42: #{_suds_depth_impl.1} parent=5 // pred_check_branch
      %450 = sbr.rel (%p448) target = $region44
    $region43: #{_suds_depth_impl.1} parent=5 // pred_region
      %s451 = ssub.s32 %s11, 2
      // Predicated region
      $region45: #{_suds_depth_impl.1} parent=43 // pred_check
        %p452 = pneg %p92
      $region46: #{_suds_depth_impl.1} parent=43 // pred_check_branch
        %454 = sbr.rel (%p452) target = $region48
      $region47: #{_suds_depth_impl.1} parent=43 // pred_region
        %s455 = smul.u32 8, %s17
        %p456 = scmp.lt.s32.totalorder %s455, 15
        %s457 = scalar_select %p456, %s455, 15
        %s458 = smul.addr %s457, 8
        %s459 = scalar_lea.vmem %s2, %s458
      $region48: #{_suds_depth_impl.1} parent=43 // pred_fallthru
        _
      // Predicated region
      $region49: #{_suds_depth_impl.1} parent=43 // pred_check
        %p460 = pneg %p118
      $region50: #{_suds_depth_impl.1} parent=43 // pred_check_branch
        %462 = sbr.rel (%p460) target = $region52
      $region51: #{_suds_depth_impl.1} parent=43 // pred_region
        %s463 = smul.u32 8, %s17
        %p464 = scmp.lt.s32.totalorder %s463, 15
        %s465 = scalar_select %p464, %s463, 15
        %s466 = smul.addr %s465, 8
        %s467 = scalar_lea.vmem %s3, %s466
      $region52: #{_suds_depth_impl.1} parent=43 // pred_fallthru
        _
      // Predicated region
      $region53: #{_suds_depth_impl.1} parent=43 // pred_check
        %p468 = pneg %p144
      $region54: #{_suds_depth_impl.1} parent=43 // pred_check_branch
        %470 = sbr.rel (%p468) target = $region56
      $region55: #{_suds_depth_impl.1} parent=43 // pred_region
        %s471 = smul.u32 8, %s17
        %p472 = scmp.lt.s32.totalorder %s471, 15
        %s473 = scalar_select %p472, %s471, 15
        %s474 = smul.addr %s473, 8
        %s475 = scalar_lea.vmem %s4, %s474
      $region56: #{_suds_depth_impl.1} parent=43 // pred_fallthru
        _
    $region44: #{_suds_depth_impl.1} parent=5 // pred_fallthru
      _
  $region6: #{_suds_depth_impl.1} parent=0 // loop_footer
    %s15 = sadd.s32 1, %s11
  $region7: #{_suds_depth_impl.1} parent=0 // loop_footer_branch
    %10 = sbr.rel target = $region3
  $region8: #{_suds_depth_impl.1} parent=0 // loop_exit
    _

</llo_original>
